<compile_context>
chip_gen: v6e
topology: v6e:2x2x1
jax: 0.10.0
libtpu: 0.0.40
codegen_flags: <defaults>
</compile_context>

<pallas_src>
import re

import jax
import jax.numpy as jnp
import numpy as np
from jax.experimental import pallas as pl
from jax.experimental.pallas import tpu as pltpu

PAD_IDX = 1  # onmt.io.PAD_WORD ('<blank>') index in tgt_dict
_NEG_BIG = -1e30  # finite stand-in for -inf (exp() underflows to exactly 0 in f32)


def _round_up(x, m):
    return ((x + m - 1) // m) * m


def _vmem_capacity_bytes():
    try:
        cap = getattr(pltpu.get_tpu_info(), "vmem_capacity_bytes", None)
        if cap:
            return int(cap)
    except Exception:
        pass
    return 64 * 1024 * 1024  # conservative default (v7x per-TC)


def _pick_row_tile(n_rows, d, vp, sp, budget_bytes):
    """Largest row tile (multiple of 8, <= 512) whose blocks fit the VMEM budget."""
    # resident params (counted x2 in case the pipeliner double-buffers constant blocks)
    fixed = 2 * 4 * (d * vp + vp + d + 1)
    per_row = 2 * 4 * (d + sp) + 2 * 4 * (vp + sp)  # dbl-buffered input + output blocks
    tn = (budget_bytes - fixed) // per_row
    tn = max(8, min(512, (int(tn) // 8) * 8))
    return min(tn, _round_up(n_rows, 8))


# ---------------------------------------------------------------------------
# Kernel A (row-tiled, pipelined, all outputs lane-dense):
#   logits  = hidden @ W_masked_padded + b_masked_padded      (one MXU pass, [tn, Vp])
#   z_copy  = sum(hidden * wc_row) + bc                        (VPU/XLU, [tn, 1])
#   p_copy  = sigmoid(z_copy)
#   prob    = exp(logits - max) * ((1 - p_copy) / sum)   == softmax * (1 - p_copy)
#   mulattn = attn * p_copy                                    ([tn, Sp], lane-dense)
# ---------------------------------------------------------------------------
def _gen_kernel(hid_ref, w_ref, b_ref, wc_ref, bc_ref, attn_ref,
                prob_ref, mulattn_ref):
    h = hid_ref[...]                                                  # [tn, D]
    logits = jnp.dot(h, w_ref[...], preferred_element_type=jnp.float32)
    logits = logits + b_ref[...]                                      # [tn, Vp]
    m = jnp.max(logits, axis=1, keepdims=True)
    e = jnp.exp(logits - m)                                           # masked/pad cols -> 0
    s = jnp.sum(e, axis=1, keepdims=True)

    z_copy = jnp.sum(h * wc_ref[...], axis=1, keepdims=True) + bc_ref[...]   # [tn, 1]
    p_copy = jax.nn.sigmoid(z_copy)

    prob_ref[...] = e * ((1.0 - p_copy) / s)
    mulattn_ref[...] = attn_ref[...] * p_copy


# ---------------------------------------------------------------------------
# Kernel B: per (batch, t-tile) one contiguous 2-D MXU matmul.
#   out[b, t_tile, :] = mul_attn[b, t_tile, :] @ src_map[b, :, :]
# ---------------------------------------------------------------------------
def _copy_kernel(ma_ref, sm_ref, out_ref):
    # ma_ref: [1, tt, Sp]   sm_ref: [1, Sp, Cp]   out_ref: [1, tt, Cp]
    out_ref[0] = jnp.dot(ma_ref[0], sm_ref[0], preferred_element_type=jnp.float32)


# ---------------------------------------------------------------------------
# Wrapper (parameter folding / padding / layout plumbing in plain JAX)
# ---------------------------------------------------------------------------
def copy_generator_forward(hidden, attn, src_map, params, tgt_itos,
                           pad_idx=PAD_IDX):
    N, D = hidden.shape
    N2, slen = attn.shape
    slen_, batch, cvocab = src_map.shape
    assert N == N2 and slen == slen_ and N % batch == 0
    tlen = N // batch

    W, b, Wc, bc = params["W"], params["b"], params["Wc"], params["bc"]
    V = W.shape[1]

    # trace-time equivalent of the PyTorch regex check on tgt_dict.itos[4:25]
    mask_special = all(
        re.match(r"(AGENT|PATIENT|BRIDGE)-\d", tok, flags=0) is not None
        for tok in tgt_itos[4:25]
    )

    Vp = _round_up(V, 128)
    Sp = _round_up(slen, 128)
    Cp = _round_up(cvocab, 128)

    # ---- fold masking + lane padding into the parameters (no iota/where in-kernel) ----
    mask_cols = [pad_idx] + (list(range(4, min(25, V))) if mask_special else [])
    mask_cols = np.array(sorted(set(mask_cols)), dtype=np.int32)
    w_masked = W.astype(jnp.float32).at[:, mask_cols].set(0.0)
    b_masked = b.astype(jnp.float32).at[mask_cols].set(_NEG_BIG)
    w_ext = jnp.zeros((D, Vp), jnp.float32).at[:, :V].set(w_masked)
    b_ext = jnp.full((1, Vp), _NEG_BIG, jnp.float32).at[:, :V].set(b_masked.reshape(1, V))
    wc_row = Wc.reshape(1, D).astype(jnp.float32)
    bc_sc = bc.reshape(1, 1).astype(jnp.float32)

    # lane padding of the small activations (zeros -> exact results after matmul)
    attn_p = jnp.pad(attn, ((0, 0), (0, Sp - slen)))
    src_map_p = jnp.pad(src_map, ((0, Sp - slen), (0, 0), (0, Cp - cvocab)))

    vmem_cap = _vmem_capacity_bytes()
    vmem_limit = int(min(0.75 * vmem_cap, 100 * 1024 * 1024))
    tn = _pick_row_tile(N, D, Vp, Sp, budget_bytes=vmem_cap // 2)

    # ---- Kernel A: row-tiled generator + copy switch + attn scaling ----
    out_prob, mul_attn = pl.pallas_call(
        _gen_kernel,
        out_shape=(jax.ShapeDtypeStruct((N, Vp), jnp.float32),
                   jax.ShapeDtypeStruct((N, Sp), jnp.float32)),
        grid=(pl.cdiv(N, tn),),
        in_specs=[pl.BlockSpec((tn, D), lambda i: (i, 0)),
                  pl.BlockSpec((D, Vp), lambda i: (0, 0)),   # weight stays resident
                  pl.BlockSpec((1, Vp), lambda i: (0, 0)),
                  pl.BlockSpec((1, D), lambda i: (0, 0)),
                  pl.BlockSpec((1, 1), lambda i: (0, 0)),
                  pl.BlockSpec((tn, Sp), lambda i: (i, 0))],
        out_specs=(pl.BlockSpec((tn, Vp), lambda i: (i, 0)),
                   pl.BlockSpec((tn, Sp), lambda i: (i, 0))),
        compiler_params=pltpu.CompilerParams(
            dimension_semantics=("parallel",),
            vmem_limit_bytes=vmem_limit),
    )(hidden, w_ext, b_ext, wc_row, bc_sc, attn_p)

    # ---- Kernel B: batched copy projection, contiguous 2-D blocks per (b, t-tile) ----
    # mul_attn[n = t*batch + b, s] == [tlen, batch, Sp] (free reshape); one cheap
    # wrapper transpose puts batch leading so kernel blocks are contiguous views.
    ma_bt = mul_attn.reshape(tlen, batch, Sp).transpose(1, 0, 2)   # [batch, tlen, Sp]
    sm_bt = src_map_p.transpose(1, 0, 2)                           # [batch, Sp, Cp]
    tt = tlen if tlen <= 512 else 512
    copy_bt = pl.pallas_call(
        _copy_kernel,
        out_shape=jax.ShapeDtypeStruct((batch, tlen, Cp), jnp.float32),
        grid=(batch, pl.cdiv(tlen, tt)),
        in_specs=[pl.BlockSpec((1, tt, Sp), lambda bi, ti: (bi, ti, 0)),
                  pl.BlockSpec((1, Sp, Cp), lambda bi, ti: (bi, 0, 0))],
        out_specs=pl.BlockSpec((1, tt, Cp), lambda bi, ti: (bi, ti, 0)),
        compiler_params=pltpu.CompilerParams(
            dimension_semantics=("parallel", "parallel"),
            vmem_limit_bytes=vmem_limit),
    )(ma_bt, sm_bt)

    # rows back to n = t*batch + b order; strip lane padding; single fused assembly pass.
    copy_prob = copy_bt.transpose(1, 0, 2).reshape(N, Cp)[:, :cvocab]
    out = jnp.concatenate([out_prob[:, :V], copy_prob], axis=1)
    return out, 0


# ---------------------------------------------------------------------------
# Pure-JAX reference (mirrors the PyTorch forward, single-attn branch)
# ---------------------------------------------------------------------------
def _reference(hidden, attn, src_map, params, tgt_itos, pad_idx=PAD_IDX):
    N, D = hidden.shape
    slen_, batch, cvocab = src_map.shape
    tlen = N // batch
    W, b, Wc, bc = params["W"], params["b"], params["Wc"], params["bc"]
    logits = hidden @ W + b
    logits = logits.at[:, pad_idx].set(-jnp.inf)
    if all(re.match(r"(AGENT|PATIENT|BRIDGE)-\d", t) is not None for t in tgt_itos[4:25]):
        logits = logits.at[:, 4:25].set(-jnp.inf)
    prob = jax.nn.softmax(logits, axis=1)
    p_copy = jax.nn.sigmoid(hidden @ Wc + bc)
    out_prob = prob * (1.0 - p_copy)
    mul_attn = attn * p_copy
    ma = mul_attn.reshape(tlen, batch, -1).transpose(1, 0, 2)        # [batch, tlen, slen]
    sm = src_map.transpose(1, 0, 2)                                  # [batch, slen, cvocab]
    cp = jnp.einsum("bts,bsc->btc", ma, sm).transpose(1, 0, 2).reshape(-1, cvocab)
    return jnp.concatenate([out_prob, cp], axis=1)


if __name__ == "__main__":
    key = jax.random.PRNGKey(0)
    k1, k2, k3, k4, k5, k6, k7 = jax.random.split(key, 7)

    # module / problem sizes
    D = 32          # input_size
    V = 16          # len(tgt_dict)
    batch, tlen = 2, 4
    N = batch * tlen
    slen = 8
    cvocab = 6

    # deterministic synthetic tgt_dict (itos); PAD at index 1
    tgt_itos = ["<unk>", "<blank>", "<s>", "</s>"] + [f"w{i}" for i in range(4, V)]

    # deterministic parameters (nn.Linear(input_size, V), nn.Linear(input_size, 1))
    params = {
        "W": (jax.random.normal(k1, (D, V), jnp.float32) * 0.1),
        "b": (jax.random.normal(k2, (V,), jnp.float32) * 0.1),
        "Wc": (jax.random.normal(k3, (D, 1), jnp.float32) * 0.1),
        "bc": (jax.random.normal(k4, (1,), jnp.float32) * 0.1),
        # TODO(synk): linear_copy2 weights only needed for the (unimplemented) tuple-attn branch.
    }

    hidden = jax.random.normal(k5, (N, D), jnp.float32)
    attn = jax.nn.softmax(jax.random.normal(k6, (N, slen), jnp.float32), axis=-1)
    src_map = (jax.random.uniform(k7, (slen, batch, cvocab), jnp.float32) > 0.7
               ).astype(jnp.float32)

    fwd = jax.jit(lambda h, a, s, p: copy_generator_forward(h, a, s, p, tgt_itos))
    out, offset = fwd(hidden, attn, src_map, params)
    out = jax.block_until_ready(out)
    assert out.shape == (N, V + cvocab) and int(offset) == 0

    ref = _reference(hidden, attn, src_map, params, tgt_itos)
    np.testing.assert_allclose(np.asarray(out), np.asarray(ref), rtol=1e-5, atol=1e-5)

    print("KERNEL_OK")
</pallas_src>

<mosaic_0001>
module attributes {stable_mosaic.version = 11 : i64} {
  func.func @_copy_kernel(%arg0: i32, %arg1: i32, %arg2: memref<1x4x128xf32, #tpu.memory_space<vmem>>, %arg3: memref<1x128x128xf32, #tpu.memory_space<vmem>>, %arg4: memref<1x4x128xf32, #tpu.memory_space<vmem>>) attributes {dimension_semantics = [#tpu.dimension_semantics<parallel>, #tpu.dimension_semantics<parallel>], iteration_bounds = array<i64: 2, 1>, scalar_prefetch = 0 : i64, scratch_operands = 0 : i64, tpu.core_type = #tpu.core_type<tc>, window_params = [{transform_indices = @transform_0, window_bounds = array<i64: 1, 4, 128>}, {transform_indices = @transform_1, window_bounds = array<i64: 1, 128, 128>}, {transform_indices = @transform_2, window_bounds = array<i64: 1, 4, 128>}]} {
    %c0 = arith.constant 0 : index
    %c0_0 = arith.constant 0 : index
    %c0_1 = arith.constant 0 : index
    %0 = vector.load %arg2[%c0, %c0_0, %c0_1] : memref<1x4x128xf32, #tpu.memory_space<vmem>>, vector<1x4x128xf32>
    %1 = vector.shape_cast %0 : vector<1x4x128xf32> to vector<4x128xf32>
    %c0_2 = arith.constant 0 : index
    %c0_3 = arith.constant 0 : index
    %c0_4 = arith.constant 0 : index
    %2 = vector.load %arg3[%c0_2, %c0_3, %c0_4] : memref<1x128x128xf32, #tpu.memory_space<vmem>>, vector<1x128x128xf32>
    %3 = vector.shape_cast %2 : vector<1x128x128xf32> to vector<128x128xf32>
    %cst = arith.constant dense<0.000000e+00> : vector<4x128xf32>
    %4 = tpu.matmul %1, %3, %cst {dimension_numbers = #tpu.dot_dimension_numbers<[1], [0], [0], [1], [0, 0, 1, 1], [], []>} : vector<4x128xf32>, vector<128x128xf32>, vector<4x128xf32> -> vector<4x128xf32>
    %c0_5 = arith.constant 0 : index
    %c0_6 = arith.constant 0 : index
    %c0_7 = arith.constant 0 : index
    %5 = vector.load %arg4[%c0_5, %c0_6, %c0_7] : memref<1x4x128xf32, #tpu.memory_space<vmem>>, vector<1x4x128xf32>
    %6 = vector.shape_cast %5 : vector<1x4x128xf32> to vector<4x128xf32>
    %7 = vector.shape_cast %4 : vector<4x128xf32> to vector<1x4x128xf32>
    tpu.vector_store %arg4[%c0_5, %c0_6, %c0_7], %7 {strides = array<i32>} : memref<1x4x128xf32, #tpu.memory_space<vmem>>, vector<1x4x128xf32>,
    return
  }
  func.func @transform_0(%arg0: i32, %arg1: i32) -> (i32, i32, i32) {
    %c0_i32 = arith.constant 0 : i32
    %c0_i32_0 = arith.constant 0 : i32
    return %arg0, %arg1, %c0_i32 : i32, i32, i32
  }
  func.func @transform_1(%arg0: i32, %arg1: i32) -> (i32, i32, i32) {
    %c0_i32 = arith.constant 0 : i32
    %c0_i32_0 = arith.constant 0 : i32
    %c0_i32_1 = arith.constant 0 : i32
    return %arg0, %c0_i32, %c0_i32_0 : i32, i32, i32
  }
  func.func @transform_2(%arg0: i32, %arg1: i32) -> (i32, i32, i32) {
    %c0_i32 = arith.constant 0 : i32
    %c0_i32_0 = arith.constant 0 : i32
    return %arg0, %arg1, %c0_i32 : i32, i32, i32
  }
}

module attributes {stable_mosaic.version = 11 : i64} {
  func.func @_gen_kernel(%arg0: i32, %arg1: memref<8x32xf32, #tpu.memory_space<vmem>>, %arg2: memref<32x128xf32, #tpu.memory_space<vmem>>, %arg3: memref<1x128xf32, #tpu.memory_space<vmem>>, %arg4: memref<1x32xf32, #tpu.memory_space<vmem>>, %arg5: memref<1x1xf32, #tpu.memory_space<vmem>>, %arg6: memref<8x128xf32, #tpu.memory_space<vmem>>, %arg7: memref<8x128xf32, #tpu.memory_space<vmem>>, %arg8: memref<8x128xf32, #tpu.memory_space<vmem>>) attributes {dimension_semantics = [#tpu.dimension_semantics<parallel>], iteration_bounds = array<i64: 1>, scalar_prefetch = 0 : i64, scratch_operands = 0 : i64, tpu.core_type = #tpu.core_type<tc>, window_params = [{transform_indices = @transform_0, window_bounds = array<i64: 8, 32>}, {pipeline_mode = #tpu.pipeline_mode<synchronous>, transform_indices = @transform_1, window_bounds = array<i64: 32, 128>}, {pipeline_mode = #tpu.pipeline_mode<synchronous>, transform_indices = @transform_2, window_bounds = array<i64: 1, 128>}, {pipeline_mode = #tpu.pipeline_mode<synchronous>, transform_indices = @transform_3, window_bounds = array<i64: 1, 32>}, {pipeline_mode = #tpu.pipeline_mode<synchronous>, transform_indices = @transform_4, window_bounds = array<i64: 1, 1>}, {transform_indices = @transform_5, window_bounds = array<i64: 8, 128>}, {transform_indices = @transform_6, window_bounds = array<i64: 8, 128>}, {transform_indices = @transform_7, window_bounds = array<i64: 8, 128>}]} {
    %c0 = arith.constant 0 : index
    %c0_0 = arith.constant 0 : index
    %0 = vector.load %arg1[%c0, %c0_0] : memref<8x32xf32, #tpu.memory_space<vmem>>, vector<8x32xf32>
    %c0_1 = arith.constant 0 : index
    %c0_2 = arith.constant 0 : index
    %1 = vector.load %arg2[%c0_1, %c0_2] : memref<32x128xf32, #tpu.memory_space<vmem>>, vector<32x128xf32>
    %cst = arith.constant dense<0.000000e+00> : vector<8x128xf32>
    %2 = tpu.matmul %0, %1, %cst {dimension_numbers = #tpu.dot_dimension_numbers<[1], [0], [0], [1], [0, 0, 1, 1], [], []>} : vector<8x32xf32>, vector<32x128xf32>, vector<8x128xf32> -> vector<8x128xf32>
    %c0_3 = arith.constant 0 : index
    %c0_4 = arith.constant 0 : index
    %3 = vector.load %arg3[%c0_3, %c0_4] : memref<1x128xf32, #tpu.memory_space<vmem>>, vector<1x128xf32>
    %4 = vector.broadcast %3 : vector<1x128xf32> to vector<8x128xf32>
    %5 = arith.addf %2, %4 : vector<8x128xf32>
    %cst_5 = arith.constant dense<0xFF800000> : vector<8xf32>
    %6 = vector.multi_reduction <maximumf>, %5, %cst_5 [1] : vector<8x128xf32> to vector<8xf32>
    %7 = vector.shape_cast %6 : vector<8xf32> to vector<8x1xf32>
    %8 = vector.broadcast %7 : vector<8x1xf32> to vector<8x128xf32>
    %9 = arith.subf %5, %8 : vector<8x128xf32>
    %10 = math.exp %9 : vector<8x128xf32>
    %cst_6 = arith.constant dense<0.000000e+00> : vector<8xf32>
    %11 = vector.multi_reduction <add>, %10, %cst_6 [1] : vector<8x128xf32> to vector<8xf32>
    %12 = vector.shape_cast %11 : vector<8xf32> to vector<8x1xf32>
    %c0_7 = arith.constant 0 : index
    %c0_8 = arith.constant 0 : index
    %13 = vector.load %arg4[%c0_7, %c0_8] : memref<1x32xf32, #tpu.memory_space<vmem>>, vector<1x32xf32>
    %14 = vector.broadcast %13 : vector<1x32xf32> to vector<8x32xf32>
    %15 = arith.mulf %0, %14 : vector<8x32xf32>
    %cst_9 = arith.constant dense<0.000000e+00> : vector<8xf32>
    %16 = vector.multi_reduction <add>, %15, %cst_9 [1] : vector<8x32xf32> to vector<8xf32>
    %17 = vector.shape_cast %16 : vector<8xf32> to vector<8x1xf32>
    %c0_10 = arith.constant 0 : index
    %c0_11 = arith.constant 0 : index
    %18 = vector.load %arg5[%c0_10, %c0_11] : memref<1x1xf32, #tpu.memory_space<vmem>>, vector<1x1xf32>
    %19 = vector.broadcast %18 : vector<1x1xf32> to vector<8x1xf32>
    %20 = arith.addf %17, %19 : vector<8x1xf32>
    %21 = arith.negf %20 : vector<8x1xf32>
    %22 = math.exp %21 : vector<8x1xf32>
    %cst_12 = arith.constant 1.000000e+00 : f32
    %23 = vector.broadcast %cst_12 : f32 to vector<8x1xf32>
    %24 = arith.addf %23, %22 : vector<8x1xf32>
    %25 = arith.divf %23, %24 : vector<8x1xf32>
    %cst_13 = arith.constant 1.000000e+00 : f32
    %26 = vector.broadcast %cst_13 : f32 to vector<8x1xf32>
    %27 = arith.subf %26, %25 : vector<8x1xf32>
    %28 = arith.divf %27, %12 : vector<8x1xf32>
    %29 = vector.broadcast %28 : vector<8x1xf32> to vector<8x128xf32>
    %30 = arith.mulf %10, %29 : vector<8x128xf32>
    %c0_14 = arith.constant 0 : index
    %c0_15 = arith.constant 0 : index
    %31 = vector.load %arg7[%c0_14, %c0_15] : memref<8x128xf32, #tpu.memory_space<vmem>>, vector<8x128xf32>
    tpu.vector_store %arg7[%c0_14, %c0_15], %30 {strides = array<i32>} : memref<8x128xf32, #tpu.memory_space<vmem>>, vector<8x128xf32>,
    %c0_16 = arith.constant 0 : index
    %c0_17 = arith.constant 0 : index
    %32 = vector.load %arg6[%c0_16, %c0_17] : memref<8x128xf32, #tpu.memory_space<vmem>>, vector<8x128xf32>
    %33 = vector.broadcast %25 : vector<8x1xf32> to vector<8x128xf32>
    %34 = arith.mulf %32, %33 : vector<8x128xf32>
    %c0_18 = arith.constant 0 : index
    %c0_19 = arith.constant 0 : index
    %35 = vector.load %arg8[%c0_18, %c0_19] : memref<8x128xf32, #tpu.memory_space<vmem>>, vector<8x128xf32>
    tpu.vector_store %arg8[%c0_18, %c0_19], %34 {strides = array<i32>} : memref<8x128xf32, #tpu.memory_space<vmem>>, vector<8x128xf32>,
    return
  }
  func.func @transform_0(%arg0: i32) -> (i32, i32) {
    %c0_i32 = arith.constant 0 : i32
    %c0_i32_0 = arith.constant 0 : i32
    return %arg0, %c0_i32 : i32, i32
  }
  func.func @transform_1(%arg0: i32) -> (i32, i32) {
    %c0_i32 = arith.constant 0 : i32
    %c0_i32_0 = arith.constant 0 : i32
    %c0_i32_1 = arith.constant 0 : i32
    return %c0_i32, %c0_i32_0 : i32, i32
  }
  func.func @transform_2(%arg0: i32) -> (i32, i32) {
    %c0_i32 = arith.constant 0 : i32
    %c0_i32_0 = arith.constant 0 : i32
    %c0_i32_1 = arith.constant 0 : i32
    return %c0_i32, %c0_i32_0 : i32, i32
  }
  func.func @transform_3(%arg0: i32) -> (i32, i32) {
    %c0_i32 = arith.constant 0 : i32
    %c0_i32_0 = arith.constant 0 : i32
    %c0_i32_1 = arith.constant 0 : i32
    return %c0_i32, %c0_i32_0 : i32, i32
  }
  func.func @transform_4(%arg0: i32) -> (i32, i32) {
    %c0_i32 = arith.constant 0 : i32
    %c0_i32_0 = arith.constant 0 : i32
    %c0_i32_1 = arith.constant 0 : i32
    return %c0_i32, %c0_i32_0 : i32, i32
  }
  func.func @transform_5(%arg0: i32) -> (i32, i32) {
    %c0_i32 = arith.constant 0 : i32
    %c0_i32_0 = arith.constant 0 : i32
    return %arg0, %c0_i32 : i32, i32
  }
  func.func @transform_6(%arg0: i32) -> (i32, i32) {
    %c0_i32 = arith.constant 0 : i32
    %c0_i32_0 = arith.constant 0 : i32
    return %arg0, %c0_i32 : i32, i32
  }
  func.func @transform_7(%arg0: i32) -> (i32, i32) {
    %c0_i32 = arith.constant 0 : i32
    %c0_i32_0 = arith.constant 0 : i32
    return %arg0, %c0_i32 : i32, i32
  }
}

</mosaic_0001>

<llo_original>
// kernel: _lambda_.3
$region0: #{_lambda_.3}
  #allocation0 [shape = 'u32[]', space=smem, size = 0x4, offset = 0x4, fixed_abs, tag = 'smem constant byte address 0x4 - core index']
  #allocation1 [shape = 'u32[144,128]{1,0:T(1,128)}', space=vmem, size = 0x12000, scoped, tag = 'internal scratch']
  %s0 = inlined_call_operand.vmem [shape: f32[2,4,128], index: 0, kind: input, shape index: {}]
  %s1 = inlined_call_operand.vmem [shape: f32[2,128,128], index: 1, kind: input, shape index: {}]
  %s2 = inlined_call_operand.vmem [shape: f32[2,4,128], index: 2, kind: output, shape index: {}]
  %s3 = sld [smem:[#allocation0]]
  $region41: #{_lambda_.3} parent=0
    _
  %s5 = ssub.s32 1, %s3
  %s6 = scalar_select 0, %s5, %s3
  loop: start=0, step=1, limit=4
  $region2: #{_lambda_.3} parent=0 // loop_pre_header
    _
  $region3: #{_lambda_.3} parent=0 // loop_header
    %s8 = sphi 0, %s12
    %p9 = scmp.ge.s32.totalorder %s8, 4
    %s15 = sphi 0, %s27
    %s16 = sphi 0, %s23
    %s17 = sphi 0, %s15
    %s18 = sphi 0, %s16
    %s19 = sphi 0, %s17
    %s20 = sphi 0, %s18
    %s32 = sphi 0, %s34
    %s35 = sphi 0, %s32
    %s36 = sphi 0, %s35
    %s52 = sphi 0, %s36
    %s58 = sphi 0, %s60
    %s61 = sphi 0, %s58
    %s62 = sphi 0, %s61
    %s78 = sphi 0, %s62
    %s86 = sphi 0, %s88
    %s89 = sphi 0, %s86
    %s90 = sphi 0, %s89
    %s106 = sphi 0, %s90
  $region4: #{_lambda_.3} parent=0 // loop_header_branch
    %11 = sbr.rel (%p9) target = $region8
  $region5: #{_lambda_.3} parent=0 // loop_body
    %s13 = ssub.s32 %s8, 1
    %s14 = ssub.s32 %s8, 2
    %s21 = sadd.s32 1, %s16
    %p22 = scmp.ge.s32.totalorder %s21, 1
    %s23 = scalar_select %p22, 0, %s21
    %s24 = sadd.s32 1, %s15
    %s25 = scalar_select %p22, %s24, %s15
    %p26 = scmp.ge.s32.totalorder %s25, 2
    %s27 = scalar_select %p26, 0, %s25
    %s28 = ssub.s32 %s15, %s27
    %s29 = ssub.s32 %s16, %s23
    %s30 = sor.u32 %s28, %s29
    %p31 = scmp.eq.s32.totalorder %s30, 0
    %s33 = sadd.s32 %s32, 1
    %s34 = scalar_select %p31, %s32, %s33
    %p37 = pneg %p31
    %p38 = scmp.eq.s32.totalorder %s8, 1
    %p39 = por %p37, %p38
    %p40 = scmp.ne.s32.totalorder %s32, %s35
    %p41 = scmp.eq.s32.totalorder %s8, 0
    %p42 = por %p40, %p41
    %p43 = scmp.ne.s32.totalorder %s32, %s35
    %p44 = scmp.eq.s32.totalorder %s13, 1
    %p45 = por %p43, %p44
    %p46 = scmp.ne.s32.totalorder %s35, %s36
    %p47 = scmp.eq.s32.totalorder %s13, 0
    %p48 = por %p46, %p47
    %p49 = scmp.ne.s32.totalorder %s35, %s36
    %p50 = scmp.eq.s32.totalorder %s14, 1
    %p51 = por %p49, %p50
    %p53 = scmp.ne.s32.totalorder %s36, %s52
    %p54 = scmp.eq.s32.totalorder %s14, 0
    %p55 = por %p53, %p54
    %s56 = ssub.s32 %s15, %s27
    %p57 = scmp.eq.s32.totalorder %s56, 0
    %s59 = sadd.s32 %s58, 1
    %s60 = scalar_select %p57, %s58, %s59
    %p63 = pneg %p57
    %p64 = scmp.eq.s32.totalorder %s8, 1
    %p65 = por %p63, %p64
    %p66 = scmp.ne.s32.totalorder %s58, %s61
    %p67 = scmp.eq.s32.totalorder %s8, 0
    %p68 = por %p66, %p67
    %p69 = scmp.ne.s32.totalorder %s58, %s61
    %p70 = scmp.eq.s32.totalorder %s13, 1
    %p71 = por %p69, %p70
    %p72 = scmp.ne.s32.totalorder %s61, %s62
    %p73 = scmp.eq.s32.totalorder %s13, 0
    %p74 = por %p72, %p73
    %p75 = scmp.ne.s32.totalorder %s61, %s62
    %p76 = scmp.eq.s32.totalorder %s14, 1
    %p77 = por %p75, %p76
    %p79 = scmp.ne.s32.totalorder %s62, %s78
    %p80 = scmp.eq.s32.totalorder %s14, 0
    %p81 = por %p79, %p80
    %s82 = ssub.s32 %s15, %s27
    %s83 = ssub.s32 %s16, %s23
    %s84 = sor.u32 %s82, %s83
    %p85 = scmp.eq.s32.totalorder %s84, 0
    %s87 = sadd.s32 %s86, 1
    %s88 = scalar_select %p85, %s86, %s87
    %p91 = pneg %p85
    %p92 = scmp.eq.s32.totalorder %s8, 1
    %p93 = por %p91, %p92
    %p94 = scmp.ne.s32.totalorder %s86, %s89
    %p95 = scmp.eq.s32.totalorder %s8, 0
    %p96 = por %p94, %p95
    %p97 = scmp.ne.s32.totalorder %s86, %s89
    %p98 = scmp.eq.s32.totalorder %s13, 1
    %p99 = por %p97, %p98
    %p100 = scmp.ne.s32.totalorder %s89, %s90
    %p101 = scmp.eq.s32.totalorder %s13, 0
    %p102 = por %p100, %p101
    %p103 = scmp.ne.s32.totalorder %s89, %s90
    %p104 = scmp.eq.s32.totalorder %s14, 1
    %p105 = por %p103, %p104
    %p107 = scmp.ne.s32.totalorder %s90, %s106
    %p108 = scmp.eq.s32.totalorder %s14, 0
    %p109 = por %p107, %p108
    %p110 = scmp.le.s32.totalorder 1, %s8
    %p111 = scmp.lt.s32.totalorder %s8, 3
    %p112 = pnand %p110, %p111
    %p113 = pneg %p112
    // Predicated region
    $region9: #{_lambda_.3} parent=5 // pred_check
      _
    $region10: #{_lambda_.3} parent=5 // pred_check_branch
      %115 = sbr.rel (%p112) target = $region12
    $region11: #{_lambda_.3} parent=5 // pred_region
      %s116 = ssub.s32 %s8, 1
    $region12: #{_lambda_.3} parent=5 // pred_fallthru
      _
    %p117 = scmp.lt.s32.totalorder %s8, 2
    // Predicated region
    $region13: #{_lambda_.3} parent=5 // pred_check
      %p118 = pneg %p117
    $region14: #{_lambda_.3} parent=5 // pred_check_branch
      %120 = sbr.rel (%p118) target = $region16
    $region15: #{_lambda_.3} parent=5 // pred_region
      // Predicated region
      $region17: #{_lambda_.3} parent=15 // pred_check
        %p121 = pneg %p42
      $region18: #{_lambda_.3} parent=15 // pred_check_branch
        %123 = sbr.rel (%p121) target = $region20
      $region19: #{_lambda_.3} parent=15 // pred_region
        %p124 = scmp.lt.s32.totalorder %s15, 1
        %s125 = scalar_select %p124, %s15, 1
        %p126 = scmp.lt.s32.totalorder %s16, 0
        %s127 = scalar_select %p126, %s16, 0
        %s128 = sadd.s32 %s127, %s125
        %s129 = smul.addr %s128, 4
        %s130 = scalar_lea.vmem %s0, %s129
      $region20: #{_lambda_.3} parent=15 // pred_fallthru
        _
      // Predicated region
      $region21: #{_lambda_.3} parent=15 // pred_check
        %p131 = pneg %p68
      $region22: #{_lambda_.3} parent=15 // pred_check_branch
        %133 = sbr.rel (%p131) target = $region24
      $region23: #{_lambda_.3} parent=15 // pred_region
        %p134 = scmp.lt.s32.totalorder %s15, 1
        %s135 = scalar_select %p134, %s15, 1
        %s136 = smul.addr %s135, 16
        %s137 = smul.addr %s136, 8
        %s138 = scalar_lea.vmem %s1, %s137
      $region24: #{_lambda_.3} parent=15 // pred_fallthru
        _
    $region16: #{_lambda_.3} parent=5 // pred_fallthru
      _
    %p139 = scmp.le.s32.totalorder 1, %s8
    %p140 = scmp.lt.s32.totalorder %s8, 3
    %p141 = pnand %p139, %p140
    %p142 = pneg %p141
    // Predicated region
    $region25: #{_lambda_.3} parent=5 // pred_check
      _
    $region26: #{_lambda_.3} parent=5 // pred_check_branch
      %144 = sbr.rel (%p141) target = $region28
    $region27: #{_lambda_.3} parent=5 // pred_region
      %s145 = ssub.s32 %s8, 1
      %p146 = scmp.lt.s32.totalorder %s17, 1
      %s147 = scalar_select %p146, %s17, 1
      %p148 = scmp.lt.s32.totalorder %s18, 0
      %s149 = scalar_select %p148, %s18, 0
      %s150 = sadd.s32 %s149, %s147
      %s151 = smul.addr %s150, 4
      %s152 = scalar_lea.vmem %s0, %s151
      %p153 = pneg %p48
      %p154 = pneg %p45
      %p155 = scmp.lt.s32.totalorder %s17, 1
      %s156 = scalar_select %p155, %s17, 1
      %s157 = smul.addr %s156, 16
      %s158 = smul.addr %s157, 8
      %s159 = scalar_lea.vmem %s1, %s158
      %p160 = pneg %p74
      %p161 = pneg %p71
      %p162 = pneg %p102
      %p163 = pneg %p99
      %p164 = scmp.lt.s32.totalorder %s17, 1
      %s165 = scalar_select %p164, %s17, 1
      %p166 = scmp.lt.s32.totalorder %s18, 0
      %s167 = scalar_select %p166, %s18, 0
      %s168 = sadd.s32 %s167, %s165
      %s169 = smul.addr %s168, 4
      %s170 = scalar_lea.vmem %s2, %s169
      %p171 = scmp.lt.s32.totalorder %s17, 1
      %s172 = scalar_select %p171, %s17, 1
      %p173 = scmp.lt.s32.totalorder %s18, 0
      %s174 = scalar_select %p173, %s18, 0
      %s175 = sadd.s32 %s174, %s172
      %s176 = smul.addr %s175, 4
      %s177 = scalar_lea.vmem %s0, %s176
      %p178 = scmp.lt.s32.totalorder %s17, 1
      %s179 = scalar_select %p178, %s17, 1
      %s180 = smul.addr %s179, 16
      %s181 = smul.addr %s180, 8
      %s182 = scalar_lea.vmem %s1, %s181
      %p183 = scmp.lt.s32.totalorder %s17, 1
      %s184 = scalar_select %p183, %s17, 1
      %p185 = scmp.lt.s32.totalorder %s18, 0
      %s186 = scalar_select %p185, %s18, 0
      %s187 = sadd.s32 %s186, %s184
      %s188 = smul.addr %s187, 4
      %s189 = scalar_lea.vmem %s2, %s188
      %v190 = vld [vmem:[%s177] sm:$0xf]
      %v191 = vld [vmem:[%s182] sm:$0xff]
      %v192 = vld [vmem:[%s182 + $0x8] sm:$0xff]
      %v193 = vld [vmem:[%s182 + $0x10] sm:$0xff]
      %v194 = vld [vmem:[%s182 + $0x18] sm:$0xff]
      %v195 = vld [vmem:[%s182 + $0x20] sm:$0xff]
      %v196 = vld [vmem:[%s182 + $0x28] sm:$0xff]
      %v197 = vld [vmem:[%s182 + $0x30] sm:$0xff]
      %v198 = vld [vmem:[%s182 + $0x38] sm:$0xff]
      %v199 = vld [vmem:[%s182 + $0x40] sm:$0xff]
      %v200 = vld [vmem:[%s182 + $0x48] sm:$0xff]
      %v201 = vld [vmem:[%s182 + $0x50] sm:$0xff]
      %v202 = vld [vmem:[%s182 + $0x58] sm:$0xff]
      %v203 = vld [vmem:[%s182 + $0x60] sm:$0xff]
      %v204 = vld [vmem:[%s182 + $0x68] sm:$0xff]
      %v205 = vld [vmem:[%s182 + $0x70] sm:$0xff]
      %v206 = vld [vmem:[%s182 + $0x78] sm:$0xff]
      %207 = vmatprep.subr.mxu0 0.0
      %208 = vmatpush1.msra.mxu0 %v206
      %209 = vmatprep.subr.mxu0 0.0
      %210 = vmatpush1.msra.mxu0 %v205
      %211 = vmatprep.subr.mxu0 0.0
      %212 = vmatpush1.msra.mxu0 %v204
      %213 = vmatprep.subr.mxu0 0.0
      %214 = vmatpush1.msra.mxu0 %v203
      %215 = vmatprep.subr.mxu0 0.0
      %216 = vmatpush1.msra.mxu0 %v202
      %217 = vmatprep.subr.mxu0 0.0
      %218 = vmatpush1.msra.mxu0 %v201
      %219 = vmatprep.subr.mxu0 0.0
      %220 = vmatpush1.msra.mxu0 %v200
      %221 = vmatprep.subr.mxu0 0.0
      %222 = vmatpush1.msra.mxu0 %v199
      %223 = vmatprep.subr.mxu0 0.0
      %224 = vmatpush1.msra.mxu0 %v198
      %225 = vmatprep.subr.mxu0 0.0
      %226 = vmatpush1.msra.mxu0 %v197
      %227 = vmatprep.subr.mxu0 0.0
      %228 = vmatpush1.msra.mxu0 %v196
      %229 = vmatprep.subr.mxu0 0.0
      %230 = vmatpush1.msra.mxu0 %v195
      %231 = vmatprep.subr.mxu0 0.0
      %232 = vmatpush1.msra.mxu0 %v194
      %233 = vmatprep.subr.mxu0 0.0
      %234 = vmatpush1.msra.mxu0 %v193
      %235 = vmatprep.subr.mxu0 0.0
      %236 = vmatpush1.msra.mxu0 %v192
      %237 = vmatprep.subr.mxu0 0.0
      %238 = vmatpush1.msra.mxu0 %v191
      %239 = vmatprep.subr.mxu0 0.0
      %240 = vmatpush2.msra.mxu0 0.0
      %241 = vmatprep.subr.mxu0 0.0
      %242 = vmatpush2.msra.mxu0 0.0
      %243 = vmatprep.subr.mxu0 0.0
      %244 = vmatpush2.msra.mxu0 0.0
      %245 = vmatprep.subr.mxu0 0.0
      %246 = vmatpush2.msra.mxu0 0.0
      %247 = vmatprep.subr.mxu0 0.0
      %248 = vmatpush2.msra.mxu0 0.0
      %249 = vmatprep.subr.mxu0 0.0
      %250 = vmatpush2.msra.mxu0 0.0
      %251 = vmatprep.subr.mxu0 0.0
      %252 = vmatpush2.msra.mxu0 0.0
      %253 = vmatprep.subr.mxu0 0.0
      %254 = vmatpush2.msra.mxu0 0.0
      %255 = vmatprep.subr.mxu0 0.0
      %256 = vmatpush2.msra.mxu0 0.0
      %257 = vmatprep.subr.mxu0 0.0
      %258 = vmatpush2.msra.mxu0 0.0
      %259 = vmatprep.subr.mxu0 0.0
      %260 = vmatpush2.msra.mxu0 0.0
      %261 = vmatprep.subr.mxu0 0.0
      %262 = vmatpush2.msra.mxu0 0.0
      %263 = vmatprep.subr.mxu0 0.0
      %264 = vmatpush2.msra.mxu0 0.0
      %265 = vmatprep.subr.mxu0 0.0
      %266 = vmatpush2.msra.mxu0 0.0
      %267 = vmatprep.subr.mxu0 0.0
      %268 = vmatpush2.msra.mxu0 0.0
      %269 = vmatprep.subr.mxu0 0.0
      %270 = vmatpush2.msra.mxu0 0.0
      %271 = vmatprep.mubr.f32.mxu0 0.0
      %272 = vmatmul.mubr.f32.gmra.mxu0 %v190
      %v273 = vpop.f32.mrf.mxu0
      %v274 = vadd.f32 0.0, %v273
      %v275 = vpop.f32.mrf.mxu0
      %276 = vdwg.mxu0
      %277 = vst [vmem:[%s189] sm:$0xf] %v274
      %p278 = scmp.lt.s32.totalorder %s17, 1
      %s279 = scalar_select %p278, %s17, 1
      %p280 = scmp.lt.s32.totalorder %s18, 0
      %s281 = scalar_select %p280, %s18, 0
      %s282 = sadd.s32 %s281, %s279
      %s283 = smul.addr %s282, 4
      %s284 = scalar_lea.vmem %s2, %s283
      // Predicated region
      $region29: #{_lambda_.3} parent=27 // pred_check
        %p285 = pneg %p99
      $region30: #{_lambda_.3} parent=27 // pred_check_branch
        %287 = sbr.rel (%p285) target = $region32
      $region31: #{_lambda_.3} parent=27 // pred_region
        _
      $region32: #{_lambda_.3} parent=27 // pred_fallthru
        _
    $region28: #{_lambda_.3} parent=5 // pred_fallthru
      _
    %p288 = scmp.le.s32.totalorder 2, %s8
    // Predicated region
    $region33: #{_lambda_.3} parent=5 // pred_check
      %p289 = pneg %p288
    $region34: #{_lambda_.3} parent=5 // pred_check_branch
      %291 = sbr.rel (%p289) target = $region36
    $region35: #{_lambda_.3} parent=5 // pred_region
      %s292 = ssub.s32 %s8, 2
      // Predicated region
      $region37: #{_lambda_.3} parent=35 // pred_check
        %p293 = pneg %p105
      $region38: #{_lambda_.3} parent=35 // pred_check_branch
        %295 = sbr.rel (%p293) target = $region40
      $region39: #{_lambda_.3} parent=35 // pred_region
        %p296 = scmp.lt.s32.totalorder %s19, 1
        %s297 = scalar_select %p296, %s19, 1
        %p298 = scmp.lt.s32.totalorder %s20, 0
        %s299 = scalar_select %p298, %s20, 0
        %s300 = sadd.s32 %s299, %s297
        %s301 = smul.addr %s300, 4
        %s302 = scalar_lea.vmem %s2, %s301
      $region40: #{_lambda_.3} parent=35 // pred_fallthru
        _
    $region36: #{_lambda_.3} parent=5 // pred_fallthru
      _
  $region6: #{_lambda_.3} parent=0 // loop_footer
    %s12 = sadd.s32 1, %s8
  $region7: #{_lambda_.3} parent=0 // loop_footer_branch
    %7 = sbr.rel target = $region3
  $region8: #{_lambda_.3} parent=0 // loop_exit
    _

// kernel: _lambda_.2
$region0: #{_lambda_.2}
  #allocation0 [shape = 'u32[]', space=smem, size = 0x4, offset = 0x4, fixed_abs, tag = 'smem constant byte address 0x4 - core index']
  #allocation1 [shape = 'u32[144,128]{1,0:T(1,128)}', space=vmem, size = 0x12000, scoped, tag = 'internal scratch']
  #allocation2 [shape = 'f32[1,1]{1,0:T(1,128)S(1)}', space=vmem, size = 0x200, scoped, tag = 'scoped memory for _lambda_.2']
  %s0 = inlined_call_operand.vmem [shape: f32[8,32], index: 0, kind: input, shape index: {}]
  %s1 = inlined_call_operand.vmem [shape: f32[32,128], index: 1, kind: input, shape index: {}]
  %s2 = inlined_call_operand.vmem [shape: f32[1,128], index: 2, kind: input, shape index: {}]
  %s3 = inlined_call_operand.vmem [shape: f32[1,32], index: 3, kind: input, shape index: {}]
  %s4 = inlined_call_operand.<no memory space> [shape: f32[1,1], index: 4, kind: input, shape index: {}]
  %s5 = inlined_call_operand.vmem [shape: f32[8,128], index: 5, kind: input, shape index: {}]
  %s6 = inlined_call_operand.vmem [shape: f32[8,128], index: 6, kind: output, shape index: {0}]
  %s7 = inlined_call_operand.vmem [shape: f32[8,128], index: 7, kind: output, shape index: {1}]
  %8 = xla_tuple %s6, %s7
  %s9 = sld [smem:[#allocation0]]
  $region42: #{_lambda_.2} parent=0
    _
  %s11 = ssub.s32 1, %s9
  %s12 = scalar_select 0, %s11, %s9
  %v13 = vstv %s4
  %14 = vst [vmem:[#allocation2] sm:$0x1] %v13
  // Predicated region
  $region2: #{_lambda_.2} parent=0 // pred_check
    _
  $region3: #{_lambda_.2} parent=0 // pred_check_branch
    %16 = sbr.rel (0) target = $region5
  $region4: #{_lambda_.2} parent=0 // pred_region
    _
  $region5: #{_lambda_.2} parent=0 // pred_fallthru
    _
  // Predicated region
  $region6: #{_lambda_.2} parent=0 // pred_check
    _
  $region7: #{_lambda_.2} parent=0 // pred_check_branch
    %18 = sbr.rel (0) target = $region9
  $region8: #{_lambda_.2} parent=0 // pred_region
    _
  $region9: #{_lambda_.2} parent=0 // pred_fallthru
    _
  // Predicated region
  $region10: #{_lambda_.2} parent=0 // pred_check
    _
  $region11: #{_lambda_.2} parent=0 // pred_check_branch
    %20 = sbr.rel (0) target = $region13
  $region12: #{_lambda_.2} parent=0 // pred_region
    _
  $region13: #{_lambda_.2} parent=0 // pred_fallthru
    _
  // Predicated region
  $region14: #{_lambda_.2} parent=0 // pred_check
    _
  $region15: #{_lambda_.2} parent=0 // pred_check_branch
    %22 = sbr.rel (0) target = $region17
  $region16: #{_lambda_.2} parent=0 // pred_region
    _
  $region17: #{_lambda_.2} parent=0 // pred_fallthru
    _
  // Predicated region
  $region18: #{_lambda_.2} parent=0 // pred_check
    _
  $region19: #{_lambda_.2} parent=0 // pred_check_branch
    %24 = sbr.rel (0) target = $region21
  $region20: #{_lambda_.2} parent=0 // pred_region
    _
  $region21: #{_lambda_.2} parent=0 // pred_fallthru
    _
  // Predicated region
  $region22: #{_lambda_.2} parent=0 // pred_check
    _
  $region23: #{_lambda_.2} parent=0 // pred_check_branch
    %26 = sbr.rel (0) target = $region25
  $region24: #{_lambda_.2} parent=0 // pred_region
    _
  $region25: #{_lambda_.2} parent=0 // pred_fallthru
    _
  %v27 = vld [vmem:[%s0] sm:$0xff]
  %v28 = vld [vmem:[%s1] sm:$0xff]
  %v29 = vld [vmem:[%s1 + $0x8] sm:$0xff]
  %v30 = vld [vmem:[%s1 + $0x10] sm:$0xff]
  %v31 = vld [vmem:[%s1 + $0x18] sm:$0xff]
  %v32 = vld [vmem:[%s2] sm:$0x1]
  %v34 = vlaneseq
  %v35 = vshrl.u32 %v34, 7
  %v36 = vsub.s32 0, %v35
  %v37 = vrot.slane %v32, %v36
  %vm39 = vcmask 261120
  %v41 = vsel %vm39, %v27, 0
  %43 = vmatprep.subr.mxu0 0.0
  %44 = vmatpush1.msra.mxu0 0.0
  %45 = vmatprep.subr.mxu0 0.0
  %46 = vmatpush1.msra.mxu0 0.0
  %47 = vmatprep.subr.mxu0 0.0
  %48 = vmatpush1.msra.mxu0 0.0
  %49 = vmatprep.subr.mxu0 0.0
  %50 = vmatpush1.msra.mxu0 0.0
  %51 = vmatprep.subr.mxu0 0.0
  %52 = vmatpush1.msra.mxu0 0.0
  %53 = vmatprep.subr.mxu0 0.0
  %54 = vmatpush1.msra.mxu0 0.0
  %55 = vmatprep.subr.mxu0 0.0
  %56 = vmatpush1.msra.mxu0 0.0
  %57 = vmatprep.subr.mxu0 0.0
  %58 = vmatpush1.msra.mxu0 0.0
  %59 = vmatprep.subr.mxu0 0.0
  %60 = vmatpush1.msra.mxu0 0.0
  %61 = vmatprep.subr.mxu0 0.0
  %62 = vmatpush1.msra.mxu0 0.0
  %63 = vmatprep.subr.mxu0 0.0
  %64 = vmatpush1.msra.mxu0 0.0
  %65 = vmatprep.subr.mxu0 0.0
  %66 = vmatpush1.msra.mxu0 0.0
  %67 = vmatprep.subr.mxu0 0.0
  %68 = vmatpush1.msra.mxu0 %v31
  %69 = vmatprep.subr.mxu0 0.0
  %70 = vmatpush1.msra.mxu0 %v30
  %71 = vmatprep.subr.mxu0 0.0
  %72 = vmatpush1.msra.mxu0 %v29
  %73 = vmatprep.subr.mxu0 0.0
  %74 = vmatpush1.msra.mxu0 %v28
  %75 = vmatprep.subr.mxu0 0.0
  %76 = vmatpush2.msra.mxu0 0.0
  %77 = vmatprep.subr.mxu0 0.0
  %78 = vmatpush2.msra.mxu0 0.0
  %79 = vmatprep.subr.mxu0 0.0
  %80 = vmatpush2.msra.mxu0 0.0
  %81 = vmatprep.subr.mxu0 0.0
  %82 = vmatpush2.msra.mxu0 0.0
  %83 = vmatprep.subr.mxu0 0.0
  %84 = vmatpush2.msra.mxu0 0.0
  %85 = vmatprep.subr.mxu0 0.0
  %86 = vmatpush2.msra.mxu0 0.0
  %87 = vmatprep.subr.mxu0 0.0
  %88 = vmatpush2.msra.mxu0 0.0
  %89 = vmatprep.subr.mxu0 0.0
  %90 = vmatpush2.msra.mxu0 0.0
  %91 = vmatprep.subr.mxu0 0.0
  %92 = vmatpush2.msra.mxu0 0.0
  %93 = vmatprep.subr.mxu0 0.0
  %94 = vmatpush2.msra.mxu0 0.0
  %95 = vmatprep.subr.mxu0 0.0
  %96 = vmatpush2.msra.mxu0 0.0
  %97 = vmatprep.subr.mxu0 0.0
  %98 = vmatpush2.msra.mxu0 0.0
  %99 = vmatprep.subr.mxu0 0.0
  %100 = vmatpush2.msra.mxu0 0.0
  %101 = vmatprep.subr.mxu0 0.0
  %102 = vmatpush2.msra.mxu0 0.0
  %103 = vmatprep.subr.mxu0 0.0
  %104 = vmatpush2.msra.mxu0 0.0
  %105 = vmatprep.subr.mxu0 0.0
  %106 = vmatpush2.msra.mxu0 0.0
  %107 = vmatprep.mubr.f32.mxu0 0.0
  %108 = vmatmul.mubr.f32.gmra.mxu0 %v41
  %v109 = vpop.f32.mrf.mxu0
  %v110 = vadd.f32 %v37, %v109
  %v111 = vpop.f32.mrf.mxu0
  %112 = vdwg.mxu0
  %113 = vmax.xlane.f32.xlu0 %v110
  %v114 = vpop.xlane.xlu0 %113
  %v115 = vsub.f32 %v110, %v114
  %v116 = vmul.f32 %v115, 1.442695
  %v117 = vpow.pop %v116
  %118 = vadd.xlane.f32.xlu0 %v117
  %v119 = vpop.xlane.xlu0 %118
  %v120 = vld [vmem:[%s3] sm:$0x1]
  %v122 = vlaneseq
  %v123 = vshrl.u32 %v122, 7
  %v124 = vsub.s32 0, %v123
  %v125 = vrot.slane %v120, %v124
  %v127 = vmul.f32 %v27, %v125
  %v128 = vsel %vm39, %v127, 0.0
  %129 = vadd.xlane.f32.xlu0 %v128
  %v130 = vpop.xlane.xlu0 %129
  %v131 = vld [vmem:[#allocation2] sm:$0x1]
  %v133 = vlaneseq
  %v134 = vshrl.u32 %v133, 7
  %v135 = vsub.s32 0, %v134
  %v136 = vrot.slane %v131, %v135
  %v138 = vadd.f32 %v130, %v136
  %v139 = vxor.u32 %v138, 2147483648
  %v140 = vmul.f32 %v139, 1.442695
  %v141 = vpow.pop %v140
  %v142 = vadd.f32 %v141, 1.0
  %v143 = vrcp.pop %v142
  %v144 = vmul.f32 1.0, %v143
  %v145 = vsub.f32 1.0, %v144
  %v146 = vrcp.pop %v119
  %v147 = vmul.f32 %v145, %v146
  %149 = vset.pattern.permute.xlu0 0
  %150 = vperm.xlu0 %149, %v147
  %v151 = vpop.permute.xlu0 %150
  %v153 = vmul.f32 %v117, %v151
  %154 = vst [vmem:[%s6] sm:$0xff] %v153
  %v155 = vld [vmem:[%s5] sm:$0xff]
  %157 = vset.pattern.permute.xlu0 0
  %158 = vperm.xlu0 %157, %v144
  %v159 = vpop.permute.xlu0 %158
  %v161 = vmul.f32 %v155, %v159
  %162 = vst [vmem:[%s7] sm:$0xff] %v161
  // Predicated region
  $region26: #{_lambda_.2} parent=0 // pred_check
    _
  $region27: #{_lambda_.2} parent=0 // pred_check_branch
    %164 = sbr.rel (0) target = $region29
  $region28: #{_lambda_.2} parent=0 // pred_region
    _
  $region29: #{_lambda_.2} parent=0 // pred_fallthru
    _
  // Predicated region
  $region30: #{_lambda_.2} parent=0 // pred_check
    _
  $region31: #{_lambda_.2} parent=0 // pred_check_branch
    %166 = sbr.rel (0) target = $region33
  $region32: #{_lambda_.2} parent=0 // pred_region
    _
  $region33: #{_lambda_.2} parent=0 // pred_fallthru
    _
  // Predicated region
  $region34: #{_lambda_.2} parent=0 // pred_check
    _
  $region35: #{_lambda_.2} parent=0 // pred_check_branch
    %168 = sbr.rel (0) target = $region37
  $region36: #{_lambda_.2} parent=0 // pred_region
    _
  $region37: #{_lambda_.2} parent=0 // pred_fallthru
    _
  // Predicated region
  $region38: #{_lambda_.2} parent=0 // pred_check
    _
  $region39: #{_lambda_.2} parent=0 // pred_check_branch
    %170 = sbr.rel (0) target = $region41
  $region40: #{_lambda_.2} parent=0 // pred_region
    _
  $region41: #{_lambda_.2} parent=0 // pred_fallthru
    _

</llo_original>
